<compile_context>
chip_gen: v5e
topology: v5e:2x2
jax: 0.10.0
libtpu: 0.0.40
codegen_flags: <defaults>
</compile_context>

<pallas_src>
import functools

import jax
import jax.numpy as jnp
from jax.experimental import pallas as pl
from jax.experimental.pallas import tpu as pltpu

NEG_SLOPE = 0.2


def _leaky_relu(x, slope=NEG_SLOPE):
    return jnp.where(x > 0, x, slope * x)


def _dictnet_kernel(x_ref, *rest, num_layers, k, n_valid, tile_n,
                    norm_column, final_activation, matmul_dtype):
    """One grid step = (one batch element, one tile of tile_n points).

    x_ref   : (1, 3, tile_n)             VMEM (channels on sublanes, points on lanes)
    rest    : w0, b0, w1, b1, ..., feat_ref[, ssq_ref]
      w_i   : (C_out_i, C_in_i)          VMEM
      b_i   : (C_out_i, 1)               VMEM
      feat  : (1, 3k, tile_n)            VMEM (lane-dense unnormalized feature)
      ssq   : (1, k, 1)                  VMEM (per-batch column sum-of-squares,
                                               accumulated across n tiles)
    """
    if norm_column:
        feat_ref, ssq_ref = rest[-2], rest[-1]
        params = rest[:-2]
    else:
        feat_ref = rest[-1]
        params = rest[:-1]

    h = x_ref[0].astype(jnp.float32)            # (3, tile_n), lane-dense over points
    for li in range(num_layers):
        w = params[2 * li][...]                 # (C_out, C_in)
        b = params[2 * li + 1][...]             # (C_out, 1)
        c_in = w.shape[1]
        if c_in < 8:
            # Tiny contraction (first layer, K=3): broadcast FMAs on the VPU,
            # skip the MXU (padded weight tile + push/pop latency for no work).
            acc = b + w[:, 0:1] * h[0:1, :]
            for ci in range(1, c_in):
                acc = acc + w[:, ci:ci + 1] * h[ci:ci + 1, :]
            h = acc
        else:
            h = jnp.dot(w.astype(matmul_dtype), h.astype(matmul_dtype),
                        preferred_element_type=jnp.float32) + b
        if final_activation or li < num_layers - 1:
            h = _leaky_relu(h)                  # f32 elementwise (v5e-safe)

    # Lane-dense store of the unnormalized (3k, tile_n) feature block.
    feat_ref[0] = h.astype(feat_ref.dtype)

    if norm_column:
        t = pl.program_id(1)
        hsq = h * h                                              # (3k, tile_n)
        # dictionary column j collects channels j, k+j, 2k+j
        s = hsq[0:k, :] + hsq[k:2 * k, :] + hsq[2 * k:3 * k, :]  # (k, tile_n)
        if n_valid % tile_n != 0:
            # Mask the zero-padded tail lanes of the last tile.
            lane = jax.lax.broadcasted_iota(jnp.int32, (1, tile_n), 1)
            valid = n_valid - t * tile_n
            s = jnp.where(lane < valid, s, 0.0)
        tile_ssq = jnp.sum(s, axis=1, keepdims=True)             # (k, 1)

        @pl.when(t == 0)
        def _():
            ssq_ref[...] = jnp.zeros_like(ssq_ref)

        ssq_ref[0] += tile_ssq


def raw_dict_net_forward(src_pc, weights, biases, *, norm_column=True,
                         final_activation=True, tile_n=2048,
                         matmul_dtype=jnp.float32, feat_dtype=jnp.float32):
    """RawDictNetV0 forward.

    src_pc     : (B, 3, n) point cloud (PyTorch NCW layout, used as-is).
    weights[i] : (C_out_i, C_in_i)  -- PyTorch Conv1d weight with the trailing
                 kernel_size=1 dim squeezed.
    biases[i]  : (C_out_i,)
    Returns the dictionary of shape (B, 3n, k) with k = C_out_last // 3.
    """
    B, c_in0, n = src_pc.shape
    assert c_in0 == 3, "RawDictNet expects B x 3 x n point clouds"
    num_layers = len(weights)
    c_out = weights[-1].shape[0]
    assert c_out % 3 == 0, "last conv channel count must be divisible by 3"
    k = c_out // 3

    x = src_pc.astype(jnp.float32)
    if n <= tile_n:
        tn, num_t, n_pad = n, 1, n            # single full-n tile per batch
    else:
        tn = tile_n
        assert tn % 128 == 0, "tile_n must be a multiple of 128 when tiling n"
        num_t = -(-n // tn)
        n_pad = num_t * tn
        if n_pad != n:
            x = jnp.pad(x, ((0, 0), (0, 0), (0, n_pad - n)))

    kern = functools.partial(
        _dictnet_kernel, num_layers=num_layers, k=k, n_valid=n, tile_n=tn,
        norm_column=norm_column, final_activation=final_activation,
        matmul_dtype=matmul_dtype)

    in_specs = [pl.BlockSpec((1, 3, tn), lambda b, t: (b, 0, t))]
    args = [x]
    for w, bv in zip(weights, biases):
        co, ci = w.shape
        in_specs.append(pl.BlockSpec((co, ci), lambda b, t: (0, 0)))
        in_specs.append(pl.BlockSpec((co, 1), lambda b, t: (0, 0)))
        args.append(w.astype(jnp.float32))
        args.append(bv.reshape(co, 1).astype(jnp.float32))

    feat_shape = jax.ShapeDtypeStruct((B, c_out, n_pad), feat_dtype)
    feat_spec = pl.BlockSpec((1, c_out, tn), lambda b, t: (b, 0, t))
    if norm_column:
        out_shape = (feat_shape, jax.ShapeDtypeStruct((B, k, 1), jnp.float32))
        out_specs = (feat_spec, pl.BlockSpec((1, k, 1), lambda b, t: (b, 0, 0)))
        dims = ("parallel", "arbitrary")      # n axis accumulates ssq
    else:
        out_shape = feat_shape
        out_specs = feat_spec
        dims = ("parallel", "parallel")

    result = pl.pallas_call(
        kern,
        out_shape=out_shape,
        grid=(B, num_t),
        in_specs=in_specs,
        out_specs=out_specs,
        compiler_params=pltpu.CompilerParams(dimension_semantics=dims),
    )(*args)

    if norm_column:
        feat, ssq = result
    else:
        feat = result

    if n_pad != n:
        feat = feat[:, :, :n]
    feat = feat.astype(jnp.float32)

    # Layout glue (fuses with the normalization broadcast in XLA):
    # dictionary[b, 3p + r, j] = feat[b, r*k + j, p]
    d = feat.reshape(B, 3, k, n)
    d = jnp.transpose(d, (0, 3, 1, 2)).reshape(B, 3 * n, k)
    if norm_column:
        inv = jax.lax.rsqrt(ssq).reshape(B, 1, k)   # EUP rsqrt, no concat/div
        d = d * inv
    return d


def _reference_forward(src_pc, weights, biases, *, norm_column=True,
                       final_activation=True):
    """Pure-JAX reference mirroring the PyTorch module."""
    h = src_pc.astype(jnp.float32)
    num_layers = len(weights)
    for li, (w, bv) in enumerate(zip(weights, biases)):
        # Conv1d(kernel_size=1): (B, C_in, n) -> (B, C_out, n)
        h = jnp.einsum("oi,bin->bon", w, h,
                       precision=jax.lax.Precision.HIGHEST) + bv[None, :, None]
        if final_activation or li < num_layers - 1:
            h = jnp.where(h > 0, h, NEG_SLOPE * h)
    B, _, n = h.shape
    d = jnp.transpose(h, (0, 2, 1)).reshape(B, 3 * n, -1)
    if norm_column:
        d = d / jnp.sqrt(jnp.sum(d * d, axis=1, keepdims=True))
    return d


if __name__ == "__main__":
    key = jax.random.PRNGKey(0)

    def make_params(key, channels):
        ws, bs = [], []
        for i in range(len(channels) - 1):
            key, kw, kb = jax.random.split(key, 3)
            ci, co = channels[i], channels[i + 1]
            bound = 1.0 / float(ci) ** 0.5
            # Deterministic init mimicking PyTorch Conv1d default (+/- 1/sqrt(fan_in)).
            ws.append(jax.random.uniform(kw, (co, ci), jnp.float32, -bound, bound))
            bs.append(jax.random.uniform(kb, (co,), jnp.float32, -bound, bound))
        return key, ws, bs

    # ---- test 1: tiny config (opt['point_conv_channel'] = [3, 32, 12], k=4) ----
    B, n = 2, 16
    channels = [3, 32, 12]
    key, ws, bs = make_params(key, channels)
    key, kx = jax.random.split(key)
    src = jax.random.normal(kx, (B, 3, n), jnp.float32)

    out = raw_dict_net_forward(src, ws, bs, norm_column=True)
    jax.block_until_ready(out)
    ref = _reference_forward(src, ws, bs, norm_column=True)
    assert out.shape == (B, 3 * n, channels[-1] // 3)
    assert jnp.allclose(out, ref, atol=1e-4, rtol=1e-4), \
        float(jnp.max(jnp.abs(out - ref)))

    out_nn = raw_dict_net_forward(src, ws, bs, norm_column=False)
    ref_nn = _reference_forward(src, ws, bs, norm_column=False)
    assert jnp.allclose(out_nn, ref_nn, atol=1e-4, rtol=1e-4), \
        float(jnp.max(jnp.abs(out_nn - ref_nn)))

    # ---- test 2: larger config, n not a multiple of 8/128, n-tiling + masking ----
    B2, n2 = 2, 300
    channels2 = [3, 64, 64, 48]   # k = 16
    key, ws2, bs2 = make_params(key, channels2)
    key, kx2 = jax.random.split(key)
    src2 = jax.random.normal(kx2, (B2, 3, n2), jnp.float32)

    out2 = raw_dict_net_forward(src2, ws2, bs2, norm_column=True, tile_n=128)
    jax.block_until_ready(out2)
    ref2 = _reference_forward(src2, ws2, bs2, norm_column=True)
    assert out2.shape == (B2, 3 * n2, channels2[-1] // 3)
    assert jnp.allclose(out2, ref2, atol=1e-4, rtol=1e-4), \
        float(jnp.max(jnp.abs(out2 - ref2)))

    # ---- test 3: bf16 storage / bf16 matmul inputs (v6e/v7x byte reduction) ----
    out3 = raw_dict_net_forward(src2, ws2, bs2, norm_column=True, tile_n=128,
                                matmul_dtype=jnp.bfloat16,
                                feat_dtype=jnp.bfloat16)
    jax.block_until_ready(out3)
    assert jnp.allclose(out3, ref2, atol=2e-2, rtol=5e-2), \
        float(jnp.max(jnp.abs(out3 - ref2)))

    print("KERNEL_OK")
</pallas_src>

<mosaic_0001>
module attributes {stable_mosaic.version = 11 : i64} {
  func.func @_dictnet_kernel(%arg0: i32, %arg1: i32, %arg2: memref<1x3x16xf32, #tpu.memory_space<vmem>>, %arg3: memref<32x3xf32, #tpu.memory_space<vmem>>, %arg4: memref<32x1xf32, #tpu.memory_space<vmem>>, %arg5: memref<12x32xf32, #tpu.memory_space<vmem>>, %arg6: memref<12x1xf32, #tpu.memory_space<vmem>>, %arg7: memref<1x12x16xf32, #tpu.memory_space<vmem>>, %arg8: memref<1x4x1xf32, #tpu.memory_space<vmem>>) attributes {dimension_semantics = [#tpu.dimension_semantics<parallel>, #tpu.dimension_semantics<arbitrary>], iteration_bounds = array<i64: 2, 1>, scalar_prefetch = 0 : i64, scratch_operands = 0 : i64, tpu.core_type = #tpu.core_type<tc>, window_params = [{transform_indices = @transform_0, window_bounds = array<i64: 1, 3, 16>}, {pipeline_mode = #tpu.pipeline_mode<synchronous>, transform_indices = @transform_1, window_bounds = array<i64: 32, 3>}, {pipeline_mode = #tpu.pipeline_mode<synchronous>, transform_indices = @transform_2, window_bounds = array<i64: 32, 1>}, {pipeline_mode = #tpu.pipeline_mode<synchronous>, transform_indices = @transform_3, window_bounds = array<i64: 12, 32>}, {pipeline_mode = #tpu.pipeline_mode<synchronous>, transform_indices = @transform_4, window_bounds = array<i64: 12, 1>}, {transform_indices = @transform_5, window_bounds = array<i64: 1, 12, 16>}, {transform_indices = @transform_6, window_bounds = array<i64: 1, 4, 1>}]} {
    %c0 = arith.constant 0 : index
    %c0_0 = arith.constant 0 : index
    %c0_1 = arith.constant 0 : index
    %0 = vector.load %arg2[%c0, %c0_0, %c0_1] : memref<1x3x16xf32, #tpu.memory_space<vmem>>, vector<1x3x16xf32>
    %1 = vector.shape_cast %0 : vector<1x3x16xf32> to vector<3x16xf32>
    %c0_2 = arith.constant 0 : index
    %c0_3 = arith.constant 0 : index
    %2 = vector.load %arg3[%c0_2, %c0_3] : memref<32x3xf32, #tpu.memory_space<vmem>>, vector<32x3xf32>
    %c0_4 = arith.constant 0 : index
    %c0_5 = arith.constant 0 : index
    %3 = vector.load %arg4[%c0_4, %c0_5] : memref<32x1xf32, #tpu.memory_space<vmem>>, vector<32x1xf32>
    %4 = vector.extract_strided_slice %2 {offsets = [0, 0], sizes = [32, 1], strides = [1, 1]} : vector<32x3xf32> to vector<32x1xf32>
    %5 = vector.extract_strided_slice %1 {offsets = [0, 0], sizes = [1, 16], strides = [1, 1]} : vector<3x16xf32> to vector<1x16xf32>
    %6 = vector.broadcast %4 : vector<32x1xf32> to vector<32x16xf32>
    %7 = vector.broadcast %5 : vector<1x16xf32> to vector<32x16xf32>
    %8 = arith.mulf %6, %7 : vector<32x16xf32>
    %9 = vector.broadcast %3 : vector<32x1xf32> to vector<32x16xf32>
    %10 = arith.addf %9, %8 : vector<32x16xf32>
    %11 = vector.extract_strided_slice %2 {offsets = [0, 1], sizes = [32, 1], strides = [1, 1]} : vector<32x3xf32> to vector<32x1xf32>
    %12 = vector.extract_strided_slice %1 {offsets = [1, 0], sizes = [1, 16], strides = [1, 1]} : vector<3x16xf32> to vector<1x16xf32>
    %13 = vector.broadcast %11 : vector<32x1xf32> to vector<32x16xf32>
    %14 = vector.broadcast %12 : vector<1x16xf32> to vector<32x16xf32>
    %15 = arith.mulf %13, %14 : vector<32x16xf32>
    %16 = arith.addf %10, %15 : vector<32x16xf32>
    %17 = vector.extract_strided_slice %2 {offsets = [0, 2], sizes = [32, 1], strides = [1, 1]} : vector<32x3xf32> to vector<32x1xf32>
    %18 = vector.extract_strided_slice %1 {offsets = [2, 0], sizes = [1, 16], strides = [1, 1]} : vector<3x16xf32> to vector<1x16xf32>
    %19 = vector.broadcast %17 : vector<32x1xf32> to vector<32x16xf32>
    %20 = vector.broadcast %18 : vector<1x16xf32> to vector<32x16xf32>
    %21 = arith.mulf %19, %20 : vector<32x16xf32>
    %22 = arith.addf %16, %21 : vector<32x16xf32>
    %cst = arith.constant 0.000000e+00 : f32
    %23 = vector.broadcast %cst : f32 to vector<32x16xf32>
    %24 = arith.cmpf ogt, %22, %23 : vector<32x16xf32>
    %cst_6 = arith.constant 2.000000e-01 : f32
    %25 = vector.broadcast %cst_6 : f32 to vector<32x16xf32>
    %26 = arith.mulf %25, %22 : vector<32x16xf32>
    %27 = arith.select %24, %22, %26 : vector<32x16xi1>, vector<32x16xf32>
    %c0_7 = arith.constant 0 : index
    %c0_8 = arith.constant 0 : index
    %28 = vector.load %arg5[%c0_7, %c0_8] : memref<12x32xf32, #tpu.memory_space<vmem>>, vector<12x32xf32>
    %c0_9 = arith.constant 0 : index
    %c0_10 = arith.constant 0 : index
    %29 = vector.load %arg6[%c0_9, %c0_10] : memref<12x1xf32, #tpu.memory_space<vmem>>, vector<12x1xf32>
    %cst_11 = arith.constant dense<0.000000e+00> : vector<12x16xf32>
    %30 = tpu.matmul %28, %27, %cst_11 {dimension_numbers = #tpu.dot_dimension_numbers<[1], [0], [0], [1], [0, 0, 1, 1], [], []>} : vector<12x32xf32>, vector<32x16xf32>, vector<12x16xf32> -> vector<12x16xf32>
    %31 = vector.broadcast %29 : vector<12x1xf32> to vector<12x16xf32>
    %32 = arith.addf %30, %31 : vector<12x16xf32>
    %cst_12 = arith.constant 0.000000e+00 : f32
    %33 = vector.broadcast %cst_12 : f32 to vector<12x16xf32>
    %34 = arith.cmpf ogt, %32, %33 : vector<12x16xf32>
    %cst_13 = arith.constant 2.000000e-01 : f32
    %35 = vector.broadcast %cst_13 : f32 to vector<12x16xf32>
    %36 = arith.mulf %35, %32 : vector<12x16xf32>
    %37 = arith.select %34, %32, %36 : vector<12x16xi1>, vector<12x16xf32>
    %c0_14 = arith.constant 0 : index
    %c0_15 = arith.constant 0 : index
    %c0_16 = arith.constant 0 : index
    %38 = vector.load %arg7[%c0_14, %c0_15, %c0_16] : memref<1x12x16xf32, #tpu.memory_space<vmem>>, vector<1x12x16xf32>
    %39 = vector.shape_cast %38 : vector<1x12x16xf32> to vector<12x16xf32>
    %40 = vector.shape_cast %37 : vector<12x16xf32> to vector<1x12x16xf32>
    tpu.vector_store %arg7[%c0_14, %c0_15, %c0_16], %40 {strides = array<i32>} : memref<1x12x16xf32, #tpu.memory_space<vmem>>, vector<1x12x16xf32>,
    %41 = arith.mulf %37, %37 : vector<12x16xf32>
    %42 = vector.extract_strided_slice %41 {offsets = [0, 0], sizes = [4, 16], strides = [1, 1]} : vector<12x16xf32> to vector<4x16xf32>
    %43 = vector.extract_strided_slice %41 {offsets = [4, 0], sizes = [4, 16], strides = [1, 1]} : vector<12x16xf32> to vector<4x16xf32>
    %44 = arith.addf %42, %43 : vector<4x16xf32>
    %45 = vector.extract_strided_slice %41 {offsets = [8, 0], sizes = [4, 16], strides = [1, 1]} : vector<12x16xf32> to vector<4x16xf32>
    %46 = arith.addf %44, %45 : vector<4x16xf32>
    %cst_17 = arith.constant dense<0.000000e+00> : vector<4xf32>
    %47 = vector.multi_reduction <add>, %46, %cst_17 [1] : vector<4x16xf32> to vector<4xf32>
    %48 = vector.shape_cast %47 : vector<4xf32> to vector<4x1xf32>
    %c0_i32 = arith.constant 0 : i32
    %49 = arith.cmpi eq, %arg1, %c0_i32 : i32
    %50 = arith.extui %49 : i1 to i32
    %c0_i32_18 = arith.constant 0 : i32
    %51 = arith.cmpi ne, %50, %c0_i32_18 : i32
    scf.if %51 {
      %cst_25 = arith.constant 0.000000e+00 : f32
      %58 = vector.broadcast %cst_25 : f32 to vector<1x4x1xf32>
      %c0_26 = arith.constant 0 : index
      %c0_27 = arith.constant 0 : index
      %c0_28 = arith.constant 0 : index
      %59 = vector.load %arg8[%c0_26, %c0_27, %c0_28] : memref<1x4x1xf32, #tpu.memory_space<vmem>>, vector<1x4x1xf32>
      tpu.vector_store %arg8[%c0_26, %c0_27, %c0_28], %58 {strides = array<i32>} : memref<1x4x1xf32, #tpu.memory_space<vmem>>, vector<1x4x1xf32>,
    } else {
    }
    %c0_19 = arith.constant 0 : index
    %c0_20 = arith.constant 0 : index
    %c0_21 = arith.constant 0 : index
    %52 = vector.load %arg8[%c0_19, %c0_20, %c0_21] : memref<1x4x1xf32, #tpu.memory_space<vmem>>, vector<1x4x1xf32>
    %53 = vector.shape_cast %52 : vector<1x4x1xf32> to vector<4x1xf32>
    %54 = arith.addf %53, %48 : vector<4x1xf32>
    %c0_22 = arith.constant 0 : index
    %c0_23 = arith.constant 0 : index
    %c0_24 = arith.constant 0 : index
    %55 = vector.load %arg8[%c0_22, %c0_23, %c0_24] : memref<1x4x1xf32, #tpu.memory_space<vmem>>, vector<1x4x1xf32>
    %56 = vector.shape_cast %55 : vector<1x4x1xf32> to vector<4x1xf32>
    %57 = vector.shape_cast %54 : vector<4x1xf32> to vector<1x4x1xf32>
    tpu.vector_store %arg8[%c0_22, %c0_23, %c0_24], %57 {strides = array<i32>} : memref<1x4x1xf32, #tpu.memory_space<vmem>>, vector<1x4x1xf32>,
    return
  }
  func.func @transform_0(%arg0: i32, %arg1: i32) -> (i32, i32, i32) {
    %c0_i32 = arith.constant 0 : i32
    %c0_i32_0 = arith.constant 0 : i32
    return %arg0, %c0_i32, %arg1 : i32, i32, i32
  }
  func.func @transform_1(%arg0: i32, %arg1: i32) -> (i32, i32) {
    %c0_i32 = arith.constant 0 : i32
    %c0_i32_0 = arith.constant 0 : i32
    %c0_i32_1 = arith.constant 0 : i32
    return %c0_i32, %c0_i32_0 : i32, i32
  }
  func.func @transform_2(%arg0: i32, %arg1: i32) -> (i32, i32) {
    %c0_i32 = arith.constant 0 : i32
    %c0_i32_0 = arith.constant 0 : i32
    %c0_i32_1 = arith.constant 0 : i32
    return %c0_i32, %c0_i32_0 : i32, i32
  }
  func.func @transform_3(%arg0: i32, %arg1: i32) -> (i32, i32) {
    %c0_i32 = arith.constant 0 : i32
    %c0_i32_0 = arith.constant 0 : i32
    %c0_i32_1 = arith.constant 0 : i32
    return %c0_i32, %c0_i32_0 : i32, i32
  }
  func.func @transform_4(%arg0: i32, %arg1: i32) -> (i32, i32) {
    %c0_i32 = arith.constant 0 : i32
    %c0_i32_0 = arith.constant 0 : i32
    %c0_i32_1 = arith.constant 0 : i32
    return %c0_i32, %c0_i32_0 : i32, i32
  }
  func.func @transform_5(%arg0: i32, %arg1: i32) -> (i32, i32, i32) {
    %c0_i32 = arith.constant 0 : i32
    %c0_i32_0 = arith.constant 0 : i32
    return %arg0, %c0_i32, %arg1 : i32, i32, i32
  }
  func.func @transform_6(%arg0: i32, %arg1: i32) -> (i32, i32, i32) {
    %c0_i32 = arith.constant 0 : i32
    %c0_i32_0 = arith.constant 0 : i32
    %c0_i32_1 = arith.constant 0 : i32
    return %arg0, %c0_i32, %c0_i32_0 : i32, i32, i32
  }
}

</mosaic_0001>

<llo_original>
// kernel: tpu_custom_call.1
$region0: #{tpu_custom_call.1}
  #allocation0 [shape = 'u32[]', space=smem, size = 0x4, offset = 0x4, fixed_abs, tag = 'smem constant byte address 0x4 - core index']
  #allocation1 [shape = 'u32[72,128]{1,0:T(1,128)}', space=vmem, size = 0x9000, scoped, tag = 'internal scratch']
  %s0 = inlined_call_operand.vmem [shape: f32[2,3,16], index: 0, kind: input, shape index: {}]
  %s1 = inlined_call_operand.vmem [shape: f32[32,3], index: 1, kind: input, shape index: {}]
  %s2 = inlined_call_operand.vmem [shape: f32[32,1], index: 2, kind: input, shape index: {}]
  %s3 = inlined_call_operand.vmem [shape: f32[12,32], index: 3, kind: input, shape index: {}]
  %s4 = inlined_call_operand.vmem [shape: f32[12,1], index: 4, kind: input, shape index: {}]
  %s5 = inlined_call_operand.vmem [shape: f32[2,12,16], index: 5, kind: output, shape index: {0}]
  %s6 = inlined_call_operand.vmem [shape: f32[2,4,1], index: 6, kind: output, shape index: {1}]
  %7 = xla_tuple %s5, %s6
  %s8 = sld [smem:[#allocation0]]
  $region65: #{tpu_custom_call.1} parent=0
    _
  %s10 = ssub.s32 1, %s8
  %s11 = scalar_select 0, %s10, %s8
  loop: start=0, step=1, limit=4
  $region2: #{tpu_custom_call.1} parent=0 // loop_pre_header
    _
  $region3: #{tpu_custom_call.1} parent=0 // loop_header
    %s13 = sphi 0, %s17
    %p14 = scmp.ge.s32.totalorder %s13, 4
    %s20 = sphi 0, %s32
    %s21 = sphi 0, %s28
    %s22 = sphi 0, %s20
    %s23 = sphi 0, %s21
    %s24 = sphi 0, %s22
    %s25 = sphi 0, %s23
    %s37 = sphi 0, %s39
    %s40 = sphi 0, %s37
    %s41 = sphi 0, %s40
    %s57 = sphi 0, %s41
    %s61 = sphi 0, %s61
    %s63 = sphi 0, %s61
    %s64 = sphi 0, %s63
    %s78 = sphi 0, %s64
    %s82 = sphi 0, %s82
    %s84 = sphi 0, %s82
    %s85 = sphi 0, %s84
    %s99 = sphi 0, %s85
    %s103 = sphi 0, %s103
    %s105 = sphi 0, %s103
    %s106 = sphi 0, %s105
    %s120 = sphi 0, %s106
    %s124 = sphi 0, %s124
    %s126 = sphi 0, %s124
    %s127 = sphi 0, %s126
    %s141 = sphi 0, %s127
    %s149 = sphi 0, %s151
    %s152 = sphi 0, %s149
    %s153 = sphi 0, %s152
    %s169 = sphi 0, %s153
    %s175 = sphi 0, %s177
    %s178 = sphi 0, %s175
    %s179 = sphi 0, %s178
    %s195 = sphi 0, %s179
  $region4: #{tpu_custom_call.1} parent=0 // loop_header_branch
    %16 = sbr.rel (%p14) target = $region8
  $region5: #{tpu_custom_call.1} parent=0 // loop_body
    %s18 = ssub.s32 %s13, 1
    %s19 = ssub.s32 %s13, 2
    %s26 = sadd.s32 1, %s21
    %p27 = scmp.ge.s32.totalorder %s26, 1
    %s28 = scalar_select %p27, 0, %s26
    %s29 = sadd.s32 1, %s20
    %s30 = scalar_select %p27, %s29, %s20
    %p31 = scmp.ge.s32.totalorder %s30, 2
    %s32 = scalar_select %p31, 0, %s30
    %s33 = ssub.s32 %s20, %s32
    %s34 = ssub.s32 %s21, %s28
    %s35 = sor.u32 %s33, %s34
    %p36 = scmp.eq.s32.totalorder %s35, 0
    %s38 = sadd.s32 %s37, 1
    %s39 = scalar_select %p36, %s37, %s38
    %p42 = pneg %p36
    %p43 = scmp.eq.s32.totalorder %s13, 1
    %p44 = por %p42, %p43
    %p45 = scmp.ne.s32.totalorder %s37, %s40
    %p46 = scmp.eq.s32.totalorder %s13, 0
    %p47 = por %p45, %p46
    %p48 = scmp.ne.s32.totalorder %s37, %s40
    %p49 = scmp.eq.s32.totalorder %s18, 1
    %p50 = por %p48, %p49
    %p51 = scmp.ne.s32.totalorder %s40, %s41
    %p52 = scmp.eq.s32.totalorder %s18, 0
    %p53 = por %p51, %p52
    %p54 = scmp.ne.s32.totalorder %s40, %s41
    %p55 = scmp.eq.s32.totalorder %s19, 1
    %p56 = por %p54, %p55
    %p58 = scmp.ne.s32.totalorder %s41, %s57
    %p59 = scmp.eq.s32.totalorder %s19, 0
    %p60 = por %p58, %p59
    %s62 = sadd.s32 %s61, 1
    %p65 = scmp.eq.s32.totalorder %s13, 1
    %p66 = scmp.ne.s32.totalorder %s61, %s63
    %p67 = scmp.eq.s32.totalorder %s13, 0
    %p68 = por %p66, %p67
    %p69 = scmp.ne.s32.totalorder %s61, %s63
    %p70 = scmp.eq.s32.totalorder %s18, 1
    %p71 = por %p69, %p70
    %p72 = scmp.ne.s32.totalorder %s63, %s64
    %p73 = scmp.eq.s32.totalorder %s18, 0
    %p74 = por %p72, %p73
    %p75 = scmp.ne.s32.totalorder %s63, %s64
    %p76 = scmp.eq.s32.totalorder %s19, 1
    %p77 = por %p75, %p76
    %p79 = scmp.ne.s32.totalorder %s64, %s78
    %p80 = scmp.eq.s32.totalorder %s19, 0
    %p81 = por %p79, %p80
    %s83 = sadd.s32 %s82, 1
    %p86 = scmp.eq.s32.totalorder %s13, 1
    %p87 = scmp.ne.s32.totalorder %s82, %s84
    %p88 = scmp.eq.s32.totalorder %s13, 0
    %p89 = por %p87, %p88
    %p90 = scmp.ne.s32.totalorder %s82, %s84
    %p91 = scmp.eq.s32.totalorder %s18, 1
    %p92 = por %p90, %p91
    %p93 = scmp.ne.s32.totalorder %s84, %s85
    %p94 = scmp.eq.s32.totalorder %s18, 0
    %p95 = por %p93, %p94
    %p96 = scmp.ne.s32.totalorder %s84, %s85
    %p97 = scmp.eq.s32.totalorder %s19, 1
    %p98 = por %p96, %p97
    %p100 = scmp.ne.s32.totalorder %s85, %s99
    %p101 = scmp.eq.s32.totalorder %s19, 0
    %p102 = por %p100, %p101
    %s104 = sadd.s32 %s103, 1
    %p107 = scmp.eq.s32.totalorder %s13, 1
    %p108 = scmp.ne.s32.totalorder %s103, %s105
    %p109 = scmp.eq.s32.totalorder %s13, 0
    %p110 = por %p108, %p109
    %p111 = scmp.ne.s32.totalorder %s103, %s105
    %p112 = scmp.eq.s32.totalorder %s18, 1
    %p113 = por %p111, %p112
    %p114 = scmp.ne.s32.totalorder %s105, %s106
    %p115 = scmp.eq.s32.totalorder %s18, 0
    %p116 = por %p114, %p115
    %p117 = scmp.ne.s32.totalorder %s105, %s106
    %p118 = scmp.eq.s32.totalorder %s19, 1
    %p119 = por %p117, %p118
    %p121 = scmp.ne.s32.totalorder %s106, %s120
    %p122 = scmp.eq.s32.totalorder %s19, 0
    %p123 = por %p121, %p122
    %s125 = sadd.s32 %s124, 1
    %p128 = scmp.eq.s32.totalorder %s13, 1
    %p129 = scmp.ne.s32.totalorder %s124, %s126
    %p130 = scmp.eq.s32.totalorder %s13, 0
    %p131 = por %p129, %p130
    %p132 = scmp.ne.s32.totalorder %s124, %s126
    %p133 = scmp.eq.s32.totalorder %s18, 1
    %p134 = por %p132, %p133
    %p135 = scmp.ne.s32.totalorder %s126, %s127
    %p136 = scmp.eq.s32.totalorder %s18, 0
    %p137 = por %p135, %p136
    %p138 = scmp.ne.s32.totalorder %s126, %s127
    %p139 = scmp.eq.s32.totalorder %s19, 1
    %p140 = por %p138, %p139
    %p142 = scmp.ne.s32.totalorder %s127, %s141
    %p143 = scmp.eq.s32.totalorder %s19, 0
    %p144 = por %p142, %p143
    %s145 = ssub.s32 %s20, %s32
    %s146 = ssub.s32 %s21, %s28
    %s147 = sor.u32 %s145, %s146
    %p148 = scmp.eq.s32.totalorder %s147, 0
    %s150 = sadd.s32 %s149, 1
    %s151 = scalar_select %p148, %s149, %s150
    %p154 = pneg %p148
    %p155 = scmp.eq.s32.totalorder %s13, 1
    %p156 = por %p154, %p155
    %p157 = scmp.ne.s32.totalorder %s149, %s152
    %p158 = scmp.eq.s32.totalorder %s13, 0
    %p159 = por %p157, %p158
    %p160 = scmp.ne.s32.totalorder %s149, %s152
    %p161 = scmp.eq.s32.totalorder %s18, 1
    %p162 = por %p160, %p161
    %p163 = scmp.ne.s32.totalorder %s152, %s153
    %p164 = scmp.eq.s32.totalorder %s18, 0
    %p165 = por %p163, %p164
    %p166 = scmp.ne.s32.totalorder %s152, %s153
    %p167 = scmp.eq.s32.totalorder %s19, 1
    %p168 = por %p166, %p167
    %p170 = scmp.ne.s32.totalorder %s153, %s169
    %p171 = scmp.eq.s32.totalorder %s19, 0
    %p172 = por %p170, %p171
    %s173 = ssub.s32 %s20, %s32
    %p174 = scmp.eq.s32.totalorder %s173, 0
    %s176 = sadd.s32 %s175, 1
    %s177 = scalar_select %p174, %s175, %s176
    %p180 = pneg %p174
    %p181 = scmp.eq.s32.totalorder %s13, 1
    %p182 = por %p180, %p181
    %p183 = scmp.ne.s32.totalorder %s175, %s178
    %p184 = scmp.eq.s32.totalorder %s13, 0
    %p185 = por %p183, %p184
    %p186 = scmp.ne.s32.totalorder %s175, %s178
    %p187 = scmp.eq.s32.totalorder %s18, 1
    %p188 = por %p186, %p187
    %p189 = scmp.ne.s32.totalorder %s178, %s179
    %p190 = scmp.eq.s32.totalorder %s18, 0
    %p191 = por %p189, %p190
    %p192 = scmp.ne.s32.totalorder %s178, %s179
    %p193 = scmp.eq.s32.totalorder %s19, 1
    %p194 = por %p192, %p193
    %p196 = scmp.ne.s32.totalorder %s179, %s195
    %p197 = scmp.eq.s32.totalorder %s19, 0
    %p198 = por %p196, %p197
    %p199 = scmp.le.s32.totalorder 1, %s13
    %p200 = scmp.lt.s32.totalorder %s13, 3
    %p201 = pnand %p199, %p200
    %p202 = pneg %p201
    // Predicated region
    $region9: #{tpu_custom_call.1} parent=5 // pred_check
      _
    $region10: #{tpu_custom_call.1} parent=5 // pred_check_branch
      %204 = sbr.rel (%p201) target = $region12
    $region11: #{tpu_custom_call.1} parent=5 // pred_region
      %s205 = ssub.s32 %s13, 1
      // Predicated region
      $region13: #{tpu_custom_call.1} parent=11 // pred_check
        %p206 = pneg %p74
      $region14: #{tpu_custom_call.1} parent=11 // pred_check_branch
        %208 = sbr.rel (%p206) target = $region16
      $region15: #{tpu_custom_call.1} parent=11 // pred_region
        _
      $region16: #{tpu_custom_call.1} parent=11 // pred_fallthru
        _
      // Predicated region
      $region17: #{tpu_custom_call.1} parent=11 // pred_check
        %p209 = pneg %p95
      $region18: #{tpu_custom_call.1} parent=11 // pred_check_branch
        %211 = sbr.rel (%p209) target = $region20
      $region19: #{tpu_custom_call.1} parent=11 // pred_region
        _
      $region20: #{tpu_custom_call.1} parent=11 // pred_fallthru
        _
      // Predicated region
      $region21: #{tpu_custom_call.1} parent=11 // pred_check
        %p212 = pneg %p116
      $region22: #{tpu_custom_call.1} parent=11 // pred_check_branch
        %214 = sbr.rel (%p212) target = $region24
      $region23: #{tpu_custom_call.1} parent=11 // pred_region
        _
      $region24: #{tpu_custom_call.1} parent=11 // pred_fallthru
        _
      // Predicated region
      $region25: #{tpu_custom_call.1} parent=11 // pred_check
        %p215 = pneg %p137
      $region26: #{tpu_custom_call.1} parent=11 // pred_check_branch
        %217 = sbr.rel (%p215) target = $region28
      $region27: #{tpu_custom_call.1} parent=11 // pred_region
        _
      $region28: #{tpu_custom_call.1} parent=11 // pred_fallthru
        _
    $region12: #{tpu_custom_call.1} parent=5 // pred_fallthru
      _
    %p218 = scmp.lt.s32.totalorder %s13, 2
    // Predicated region
    $region29: #{tpu_custom_call.1} parent=5 // pred_check
      %p219 = pneg %p218
    $region30: #{tpu_custom_call.1} parent=5 // pred_check_branch
      %221 = sbr.rel (%p219) target = $region32
    $region31: #{tpu_custom_call.1} parent=5 // pred_region
      // Predicated region
      $region33: #{tpu_custom_call.1} parent=31 // pred_check
        %p222 = pneg %p47
      $region34: #{tpu_custom_call.1} parent=31 // pred_check_branch
        %224 = sbr.rel (%p222) target = $region36
      $region35: #{tpu_custom_call.1} parent=31 // pred_region
        %p225 = scmp.lt.s32.totalorder %s20, 1
        %s226 = scalar_select %p225, %s20, 1
        %p227 = scmp.lt.s32.totalorder %s21, 0
        %s228 = scalar_select %p227, %s21, 0
        %s229 = sadd.s32 %s228, %s226
        %s230 = smul.addr %s229, 4
        %s231 = scalar_lea.vmem %s0, %s230
      $region36: #{tpu_custom_call.1} parent=31 // pred_fallthru
        _
    $region32: #{tpu_custom_call.1} parent=5 // pred_fallthru
      _
    %p232 = scmp.le.s32.totalorder 1, %s13
    %p233 = scmp.lt.s32.totalorder %s13, 3
    %p234 = pnand %p232, %p233
    %p235 = pneg %p234
    // Predicated region
    $region37: #{tpu_custom_call.1} parent=5 // pred_check
      _
    $region38: #{tpu_custom_call.1} parent=5 // pred_check_branch
      %237 = sbr.rel (%p234) target = $region40
    $region39: #{tpu_custom_call.1} parent=5 // pred_region
      %s238 = ssub.s32 %s13, 1
      %p239 = scmp.lt.s32.totalorder %s22, 1
      %s240 = scalar_select %p239, %s22, 1
      %p241 = scmp.lt.s32.totalorder %s23, 0
      %s242 = scalar_select %p241, %s23, 0
      %s243 = sadd.s32 %s242, %s240
      %s244 = smul.addr %s243, 4
      %s245 = scalar_lea.vmem %s0, %s244
      %p246 = pneg %p53
      %p247 = pneg %p50
      %p248 = pneg %p74
      %p249 = pneg %p71
      %p250 = pneg %p95
      %p251 = pneg %p92
      %p252 = pneg %p116
      %p253 = pneg %p113
      %p254 = pneg %p137
      %p255 = pneg %p134
      %p256 = pneg %p165
      %p257 = pneg %p162
      %p258 = scmp.lt.s32.totalorder %s22, 1
      %s259 = scalar_select %p258, %s22, 1
      %p260 = scmp.lt.s32.totalorder %s23, 0
      %s261 = scalar_select %p260, %s23, 0
      %s262 = smul.addr %s259, 2
      %s263 = sadd.s32 %s261, %s262
      %s264 = smul.addr %s263, 8
      %s265 = scalar_lea.vmem %s5, %s264
      %p266 = pneg %p191
      %p267 = pneg %p188
      %p268 = scmp.lt.s32.totalorder %s22, 1
      %s269 = scalar_select %p268, %s22, 1
      %s270 = smul.addr %s269, 4
      %s271 = scalar_lea.vmem %s6, %s270
      %p272 = scmp.lt.s32.totalorder %s22, 1
      %s273 = scalar_select %p272, %s22, 1
      %p274 = scmp.lt.s32.totalorder %s23, 0
      %s275 = scalar_select %p274, %s23, 0
      %s276 = sadd.s32 %s275, %s273
      %s277 = smul.addr %s276, 4
      %s278 = scalar_lea.vmem %s0, %s277
      %p279 = scmp.lt.s32.totalorder %s22, 1
      %s280 = scalar_select %p279, %s22, 1
      %p281 = scmp.lt.s32.totalorder %s23, 0
      %s282 = scalar_select %p281, %s23, 0
      %s283 = smul.addr %s280, 2
      %s284 = sadd.s32 %s282, %s283
      %s285 = smul.addr %s284, 8
      %s286 = scalar_lea.vmem %s5, %s285
      %p287 = scmp.lt.s32.totalorder %s22, 1
      %s288 = scalar_select %p287, %s22, 1
      %s289 = smul.addr %s288, 4
      %s290 = scalar_lea.vmem %s6, %s289
      %v291 = vld [vmem:[%s278] sm:$0x7]
      %v292 = vld [vmem:[%s1] sm:$0xff]
      %v293 = vld [vmem:[%s1 + $0x8] sm:$0xff]
      %v294 = vld [vmem:[%s1 + $0x10] sm:$0xff]
      %v295 = vld [vmem:[%s1 + $0x18] sm:$0xff]
      %v296 = vld [vmem:[%s2] sm:$0xff]
      %v297 = vld [vmem:[%s2 + $0x8] sm:$0xff]
      %v298 = vld [vmem:[%s2 + $0x10] sm:$0xff]
      %v299 = vld [vmem:[%s2 + $0x18] sm:$0xff]
      %301 = vset.pattern.permute.xlu0 0
      %302 = vperm.xlu0 %301, %v292
      %v303 = vpop.permute.xlu0 %302
      %306 = vset.pattern.permute.xlu0 0
      %307 = vperm.xlu0 %306, %v293
      %v308 = vpop.permute.xlu0 %307
      %311 = vset.pattern.permute.xlu0 0
      %312 = vperm.xlu0 %311, %v294
      %v313 = vpop.permute.xlu0 %312
      %316 = vset.pattern.permute.xlu0 0
      %317 = vperm.xlu0 %316, %v295
      %v318 = vpop.permute.xlu0 %317
      %v320 = vperm.slane %v291, 0
      %v321 = vmul.f32 %v303, %v320
      %v322 = vmul.f32 %v308, %v320
      %v323 = vmul.f32 %v313, %v320
      %v324 = vmul.f32 %v318, %v320
      %326 = vset.pattern.permute.xlu0 0
      %327 = vperm.xlu0 %326, %v296
      %v328 = vpop.permute.xlu0 %327
      %331 = vset.pattern.permute.xlu0 0
      %332 = vperm.xlu0 %331, %v297
      %v333 = vpop.permute.xlu0 %332
      %336 = vset.pattern.permute.xlu0 0
      %337 = vperm.xlu0 %336, %v298
      %v338 = vpop.permute.xlu0 %337
      %341 = vset.pattern.permute.xlu0 0
      %342 = vperm.xlu0 %341, %v299
      %v343 = vpop.permute.xlu0 %342
      %v345 = vadd.f32 %v328, %v321
      %v346 = vadd.f32 %v333, %v322
      %v347 = vadd.f32 %v338, %v323
      %v348 = vadd.f32 %v343, %v324
      %349 = vset.pattern.permute.xlu0 1
      %350 = vperm.xlu0 %349, %v292
      %v351 = vpop.permute.xlu0 %350
      %353 = vset.pattern.permute.xlu0 1
      %354 = vperm.xlu0 %353, %v293
      %v355 = vpop.permute.xlu0 %354
      %357 = vset.pattern.permute.xlu0 1
      %358 = vperm.xlu0 %357, %v294
      %v359 = vpop.permute.xlu0 %358
      %361 = vset.pattern.permute.xlu0 1
      %362 = vperm.xlu0 %361, %v295
      %v363 = vpop.permute.xlu0 %362
      %v365 = vperm.slane %v291, 1
      %v366 = vmul.f32 %v351, %v365
      %v367 = vmul.f32 %v355, %v365
      %v368 = vmul.f32 %v359, %v365
      %v369 = vmul.f32 %v363, %v365
      %v370 = vadd.f32 %v345, %v366
      %v371 = vadd.f32 %v346, %v367
      %v372 = vadd.f32 %v347, %v368
      %v373 = vadd.f32 %v348, %v369
      %374 = vset.pattern.permute.xlu0 2
      %375 = vperm.xlu0 %374, %v292
      %v376 = vpop.permute.xlu0 %375
      %378 = vset.pattern.permute.xlu0 2
      %379 = vperm.xlu0 %378, %v293
      %v380 = vpop.permute.xlu0 %379
      %382 = vset.pattern.permute.xlu0 2
      %383 = vperm.xlu0 %382, %v294
      %v384 = vpop.permute.xlu0 %383
      %386 = vset.pattern.permute.xlu0 2
      %387 = vperm.xlu0 %386, %v295
      %v388 = vpop.permute.xlu0 %387
      %v390 = vperm.slane %v291, 2
      %v391 = vmul.f32 %v376, %v390
      %v392 = vmul.f32 %v380, %v390
      %v393 = vmul.f32 %v384, %v390
      %v394 = vmul.f32 %v388, %v390
      %v395 = vadd.f32 %v370, %v391
      %v396 = vadd.f32 %v371, %v392
      %v397 = vadd.f32 %v372, %v393
      %v398 = vadd.f32 %v373, %v394
      %vm399 = vcmp.gt.f32.partialorder %v395, 0.0
      %vm400 = vcmp.gt.f32.partialorder %v396, 0.0
      %vm401 = vcmp.gt.f32.partialorder %v397, 0.0
      %vm402 = vcmp.gt.f32.partialorder %v398, 0.0
      %v403 = vmul.f32 %v395, 0.2
      %v404 = vmul.f32 %v396, 0.2
      %v405 = vmul.f32 %v397, 0.2
      %v406 = vmul.f32 %v398, 0.2
      %v407 = vsel %vm399, %v395, %v403
      %v408 = vsel %vm400, %v396, %v404
      %v409 = vsel %vm401, %v397, %v405
      %v410 = vsel %vm402, %v398, %v406
      %v411 = vld [vmem:[%s3] sm:$0xff]
      %v412 = vld [vmem:[%s3 + $0x8] sm:$0xf]
      %v413 = vld [vmem:[%s4] sm:$0xff]
      %v414 = vld [vmem:[%s4 + $0x8] sm:$0xf]
      %416 = vset.pattern.permute.xlu0 0
      %417 = vperm.xlu0 %416, %v413
      %v418 = vpop.permute.xlu0 %417
      %421 = vset.pattern.permute.xlu0 0
      %422 = vperm.xlu0 %421, %v414
      %v423 = vpop.permute.xlu0 %422
      %vm425 = vcmask 261120
      %v427 = vsel %vm425, %v411, 0
      %v430 = vsel %vm425, %v412, 0
      %432 = vmatpush.msra.mxu0 0.0
      %433 = vmatpush.msra.mxu0 0.0
      %434 = vmatpush.msra.mxu0 0.0
      %435 = vmatpush.msra.mxu0 0.0
      %436 = vmatpush.msra.mxu0 0.0
      %437 = vmatpush.msra.mxu0 0.0
      %438 = vmatpush.msra.mxu0 0.0
      %439 = vmatpush.msra.mxu0 0.0
      %440 = vmatpush.msra.mxu0 0.0
      %441 = vmatpush.msra.mxu0 0.0
      %442 = vmatpush.msra.mxu0 0.0
      %443 = vmatpush.msra.mxu0 0.0
      %444 = vmatpush.msra.mxu0 %v410
      %445 = vmatpush.msra.mxu0 %v409
      %446 = vmatpush.msra.mxu0 %v408
      %447 = vmatpush.msra.mxu0 %v407
      %448 = vmatmul.f32.gmra.mxu0 %v427
      %v449 = vpop.f32.mrf.mxu0
      %v450 = vadd.f32 %v418, %v449
      %451 = vmatmul.f32.gmra.mxu0 %v430
      %v452 = vpop.f32.mrf.mxu0
      %v453 = vadd.f32 %v423, %v452
      %454 = vdwg.mxu0
      %vm455 = vcmp.gt.f32.partialorder %v450, 0.0
      %vm456 = vcmp.gt.f32.partialorder %v453, 0.0
      %v457 = vmul.f32 %v450, 0.2
      %v458 = vmul.f32 %v453, 0.2
      %v459 = vsel %vm455, %v450, %v457
      %v460 = vsel %vm456, %v453, %v458
      %vm461 = vcmask 130048
      %462 = vst.msk [vmem:[%s286] sm:$0xff] %vm461, %v459
      %vm463 = vcmask 125952
      %464 = vst.msk [vmem:[%s286 + $0x8] sm:$0xf] %vm463, %v460
      %v465 = vmul.f32 %v459, %v459
      %v466 = vmul.f32 %v460, %v460
      %v468 = vrot.slane %v465, 4
      %v470 = vadd.f32 %v465, %v468
      %v471 = vadd.f32 %v470, %v466
      %v472 = vsel %vm463, %v471, 0.0
      %473 = vadd.xlane.f32.xlu0 %v472
      %v474 = vpop.xlane.xlu0 %473
      %p475 = scmp.eq.s32.totalorder %s23, 0
      // Predicated region
      $region41: #{tpu_custom_call.1} parent=39 // pred_check
        %p476 = pneg %p475
      $region42: #{tpu_custom_call.1} parent=39 // pred_check_branch
        %478 = sbr.rel (%p476) target = $region44
      $region43: #{tpu_custom_call.1} parent=39 // pred_region
        %vm479 = vcmask 3072
        %480 = vst.msk [vmem:[%s290] sm:$0xf] %vm479, 0.0
      $region44: #{tpu_custom_call.1} parent=39 // pred_fallthru
        _
      %v481 = vld [vmem:[%s290] sm:$0xf]
      %v482 = vadd.f32 %v481, %v474
      %vm483 = vcmask 3072
      %484 = vst.msk [vmem:[%s290] sm:$0xf] %vm483, %v482
      %p485 = scmp.lt.s32.totalorder %s22, 1
      %s486 = scalar_select %p485, %s22, 1
      %p487 = scmp.lt.s32.totalorder %s23, 0
      %s488 = scalar_select %p487, %s23, 0
      %s489 = smul.addr %s486, 2
      %s490 = sadd.s32 %s488, %s489
      %s491 = smul.addr %s490, 8
      %s492 = scalar_lea.vmem %s5, %s491
      %p493 = scmp.lt.s32.totalorder %s22, 1
      %s494 = scalar_select %p493, %s22, 1
      %s495 = smul.addr %s494, 4
      %s496 = scalar_lea.vmem %s6, %s495
      // Predicated region
      $region45: #{tpu_custom_call.1} parent=39 // pred_check
        %p497 = pneg %p162
      $region46: #{tpu_custom_call.1} parent=39 // pred_check_branch
        %499 = sbr.rel (%p497) target = $region48
      $region47: #{tpu_custom_call.1} parent=39 // pred_region
        _
      $region48: #{tpu_custom_call.1} parent=39 // pred_fallthru
        _
      // Predicated region
      $region49: #{tpu_custom_call.1} parent=39 // pred_check
        %p500 = pneg %p188
      $region50: #{tpu_custom_call.1} parent=39 // pred_check_branch
        %502 = sbr.rel (%p500) target = $region52
      $region51: #{tpu_custom_call.1} parent=39 // pred_region
        _
      $region52: #{tpu_custom_call.1} parent=39 // pred_fallthru
        _
    $region40: #{tpu_custom_call.1} parent=5 // pred_fallthru
      _
    %p503 = scmp.le.s32.totalorder 2, %s13
    // Predicated region
    $region53: #{tpu_custom_call.1} parent=5 // pred_check
      %p504 = pneg %p503
    $region54: #{tpu_custom_call.1} parent=5 // pred_check_branch
      %506 = sbr.rel (%p504) target = $region56
    $region55: #{tpu_custom_call.1} parent=5 // pred_region
      %s507 = ssub.s32 %s13, 2
      // Predicated region
      $region57: #{tpu_custom_call.1} parent=55 // pred_check
        %p508 = pneg %p168
      $region58: #{tpu_custom_call.1} parent=55 // pred_check_branch
        %510 = sbr.rel (%p508) target = $region60
      $region59: #{tpu_custom_call.1} parent=55 // pred_region
        %p511 = scmp.lt.s32.totalorder %s24, 1
        %s512 = scalar_select %p511, %s24, 1
        %p513 = scmp.lt.s32.totalorder %s25, 0
        %s514 = scalar_select %p513, %s25, 0
        %s515 = smul.addr %s512, 2
        %s516 = sadd.s32 %s514, %s515
        %s517 = smul.addr %s516, 8
        %s518 = scalar_lea.vmem %s5, %s517
      $region60: #{tpu_custom_call.1} parent=55 // pred_fallthru
        _
      // Predicated region
      $region61: #{tpu_custom_call.1} parent=55 // pred_check
        %p519 = pneg %p194
      $region62: #{tpu_custom_call.1} parent=55 // pred_check_branch
        %521 = sbr.rel (%p519) target = $region64
      $region63: #{tpu_custom_call.1} parent=55 // pred_region
        %p522 = scmp.lt.s32.totalorder %s24, 1
        %s523 = scalar_select %p522, %s24, 1
        %s524 = smul.addr %s523, 4
        %s525 = scalar_lea.vmem %s6, %s524
      $region64: #{tpu_custom_call.1} parent=55 // pred_fallthru
        _
    $region56: #{tpu_custom_call.1} parent=5 // pred_fallthru
      _
  $region6: #{tpu_custom_call.1} parent=0 // loop_footer
    %s17 = sadd.s32 1, %s13
  $region7: #{tpu_custom_call.1} parent=0 // loop_footer_branch
    %12 = sbr.rel target = $region3
  $region8: #{tpu_custom_call.1} parent=0 // loop_exit
    _

</llo_original>
